<compile_context>
chip_gen: v6e
topology: v6e:2x2x1
jax: 0.10.0
libtpu: 0.0.40
codegen_flags: <defaults>
</compile_context>

<pallas_src>
import functools

import jax
import jax.numpy as jnp
from jax import lax
from jax.experimental import pallas as pl
from jax.experimental.pallas import tpu as pltpu


# ----------------------------- Pallas kernel --------------------------------

def _conv1x1_kernel(*refs, n_cls, d, g_tile, channels_last, has_bias):
    """One (group-tile, batch-tile, spatial-tile) block of the grouped 1x1 conv.

    refs (in order):
      x_ref : (B_t, G_t*d, S_t)  channels-first, or (B_t, S_t, G_t*d) channels-last
      w_ref : (G_t*n_cls, d)
      b_ref : (G_t*n_cls, 1)       only present when has_bias
      o_ref : (B_t, G_t*n_cls, S_t)   lane-dense spatial output
    """
    if has_bias:
        x_ref, w_ref, b_ref, o_ref = refs
    else:
        x_ref, w_ref, o_ref = refs
        b_ref = None

    b_t = o_ref.shape[0]
    for b in range(b_t):                       # static unroll over batch-in-tile
        for gg in range(g_tile):               # static unroll: block-diagonal groups
            w = w_ref[gg * n_cls:(gg + 1) * n_cls, :]            # (n_cls, d)
            if channels_last:
                # convert_feats fused: contract directly on the channel (minor) axis
                # of the token tile.  (If MLIR ever shows a vxpose here at large d,
                # restage x as (d, S) instead -- see perf-review note.)
                xg = x_ref[b, :, gg * d:(gg + 1) * d]            # (S_t, d)
                dn = (((1,), (1,)), ((), ()))
            else:
                xg = x_ref[b, gg * d:(gg + 1) * d, :]            # (d, S_t)
                dn = (((1,), (0,)), ((), ()))
            acc = lax.dot_general(w, xg, dimension_numbers=dn,
                                  preferred_element_type=jnp.float32)   # (n_cls, S_t)
            if has_bias:
                acc = acc + b_ref[gg * n_cls:(gg + 1) * n_cls, :]
            o_ref[b, gg * n_cls:(gg + 1) * n_cls, :] = acc.astype(o_ref.dtype)


# ------------------------------ Wrapper --------------------------------------

def _grouped_conv1x1(x, w, b, *, groups, channels_last):
    """Grouped 1x1 conv over a flattened spatial axis.

    x : (B, groups*d, S) if channels_last=False, else (B, S, groups*d)
    w : (groups*n_cls, d)          (PyTorch conv weight[..., 0, 0])
    b : (groups*n_cls,) or None
    returns (B, groups*n_cls, S)   -- lane-dense (S) output.
    """
    if channels_last:
        B, S, c_in = x.shape
    else:
        B, c_in, S = x.shape
    c_out, d = w.shape
    n_cls = c_out // groups
    assert c_in == groups * d, (c_in, groups, d)

    x_item = jnp.dtype(x.dtype).itemsize
    w_item = jnp.dtype(w.dtype).itemsize
    sub_align = max(32 // min(x_item, w_item), 8)   # 8 for f32, 16 for bf16 blocks

    # --- group packing: smallest G_tile dividing `groups` whose channel blocks are
    #     sublane-aligned; else pack all groups (full-dim blocks are exempt). ---
    g_tile = 1
    if groups > 1:
        g_tile = groups
        for gt in range(1, groups):
            if groups % gt:
                continue
            if (gt * n_cls) % sub_align == 0 and (gt * d) % sub_align == 0:
                g_tile = gt
                break
    g_steps = groups // g_tile

    # --- batch/spatial coarsening under a conservative double-buffered VMEM budget ---
    def s_candidates():
        cands, seen = [], set()
        for v in [S] + list(range(S - S % 128, 0, -128)):
            if v > 0 and S % v == 0 and v not in seen:
                seen.add(v)
                cands.append(v)
        return cands

    b_cands = [v for v in range(B, 0, -1) if B % v == 0]

    def footprint(bt, st):
        x_bytes = bt * (g_tile * d) * st * x_item
        o_bytes = bt * (g_tile * n_cls) * st * x_item
        w_bytes = (g_tile * n_cls) * d * w_item
        return 2 * (x_bytes + o_bytes) + 2 * w_bytes     # double-buffered pipeline

    budget = 16 * 1024 * 1024
    b_tile = s_tile = None
    for st in s_candidates():                 # prefer the widest lane-dense S tile
        for bt in b_cands:                    # then pack as many batch rows as fit
            if footprint(bt, st) <= budget:
                b_tile, s_tile = bt, st
                break
        if b_tile is not None:
            break
    if b_tile is None:                        # even the minimum block busts the budget
        b_tile, s_tile = 1, s_candidates()[-1]

    # Keep >= 2 parallel grid steps so v7x's two TensorCores both get work
    # (near-zero cost on v5e/v6e which have a single TC).
    if g_steps * (B // b_tile) * (S // s_tile) < 2:
        if B > 1 and B // b_tile == 1:
            b_tile = max(v for v in range(1, B) if B % v == 0)
        else:
            smaller = [v for v in s_candidates() if v < s_tile]
            if smaller:
                s_tile = smaller[0]
    b_steps, s_steps = B // b_tile, S // s_tile

    has_bias = b is not None
    kernel = functools.partial(_conv1x1_kernel, n_cls=n_cls, d=d, g_tile=g_tile,
                               channels_last=channels_last, has_bias=has_bias)

    # grid = (groups, batch, spatial): the weight/bias block index depends only on the
    # outermost axis, so W / bias are NOT re-DMA'd across the inner batch/spatial sweep.
    if channels_last:
        x_spec = pl.BlockSpec((b_tile, s_tile, g_tile * d),
                              lambda g, bi, si: (bi, si, g))
    else:
        x_spec = pl.BlockSpec((b_tile, g_tile * d, s_tile),
                              lambda g, bi, si: (bi, g, si))
    in_specs = [x_spec,
                pl.BlockSpec((g_tile * n_cls, d), lambda g, bi, si: (g, 0))]
    args = [x, w]
    if has_bias:
        in_specs.append(pl.BlockSpec((g_tile * n_cls, 1), lambda g, bi, si: (g, 0)))
        args.append(b.reshape(c_out, 1).astype(jnp.float32))

    return pl.pallas_call(
        kernel,
        out_shape=jax.ShapeDtypeStruct((B, c_out, S), x.dtype),
        grid=(g_steps, b_steps, s_steps),
        in_specs=in_specs,
        out_specs=pl.BlockSpec((b_tile, g_tile * n_cls, s_tile),
                               lambda g, bi, si: (bi, g, si)),
        compiler_params=pltpu.CompilerParams(
            dimension_semantics=("parallel", "parallel", "parallel"),
            vmem_limit_bytes=48 * 1024 * 1024),
    )(*args)


def decoder_simple_forward(x, params, *, n_cls, d_encoder, groups=1, im_size=None):
    """Pallas implementation of DecoderSimple.forward.

    x: (B, N, groups*d_encoder) tokens (square grid, N = H*W)  or
       (B, groups*d_encoder, H, W) NCHW feature map.
    Returns (B, groups*n_cls, H, W)  (optionally resized to im_size).
    """
    w = params["weight"]
    if w.ndim == 4:                                        # (c_out, d, 1, 1) conv weight
        w = w.reshape(w.shape[0], w.shape[1])
    b = params.get("bias", None)                           # bias=False is the module default

    if x.ndim == 3:
        B, N, _ = x.shape
        H = W_ = int(round(N ** 0.5))
        assert H * W_ == N, "convert_feats expects a square token grid"
        if groups == 1 or d_encoder % 128 == 0:
            # convert_feats fused into the kernel contraction (no XLA transpose,
            # no extra HBM round trip of the activation tensor).
            out = _grouped_conv1x1(x, w, b, groups=groups, channels_last=True)
        else:
            # Per-group channel slice is not lane-aligned -> explicit convert_feats.
            out = _grouped_conv1x1(jnp.transpose(x, (0, 2, 1)), w, b,
                                   groups=groups, channels_last=False)
        out = out.reshape(B, groups * n_cls, H, W_)
    else:
        B, c_in, H, W_ = x.shape
        out = _grouped_conv1x1(x.reshape(B, c_in, H * W_), w, b,
                               groups=groups, channels_last=False)
        out = out.reshape(B, groups * n_cls, H, W_)

    if im_size is not None:
        # TODO(synk): F.interpolate defaults to mode='nearest'; jax.image.resize uses
        # half-pixel centers so indices can differ for non-integer scale factors.
        out = jax.image.resize(
            out, (out.shape[0], out.shape[1], im_size[0], im_size[1]),
            method="nearest")
    return out


# ------------------------------- Main ----------------------------------------

if __name__ == "__main__":
    B, d_encoder, H, W = 2, 32, 16, 16
    n_cls = 8

    key = jax.random.PRNGKey(0)
    kx, kt, kw, kb, kg = jax.random.split(key, 5)

    # ---------- groups=1, bias=False (the module's defaults) ----------
    x_nchw = jax.random.normal(kx, (B, d_encoder, H, W), jnp.float32)
    x_tok = jax.random.normal(kt, (B, H * W, d_encoder), jnp.float32)
    w1 = jax.random.normal(kw, (n_cls, d_encoder), jnp.float32) * 0.02

    fwd1 = jax.jit(functools.partial(decoder_simple_forward,
                                     n_cls=n_cls, d_encoder=d_encoder, groups=1))
    y_nchw = fwd1(x_nchw, {"weight": w1})          # 4D NCHW path
    y_tok = fwd1(x_tok, {"weight": w1})            # 3D token path (convert_feats fused)

    # ---------- groups=1, with bias (separate kernel variant, no zero-bias DMA) ----------
    b1 = jax.random.normal(kb, (n_cls,), jnp.float32)
    y_bias = fwd1(x_nchw, {"weight": w1, "bias": b1})

    # ---------- groups=2 (grouped / block-diagonal 1x1 conv) ----------
    groups = 2
    xg = jax.random.normal(kg, (B, groups * d_encoder, H, W), jnp.float32)
    wg = jax.random.normal(kw, (groups * n_cls, d_encoder), jnp.float32) * 0.02
    fwd2 = jax.jit(functools.partial(decoder_simple_forward,
                                     n_cls=n_cls, d_encoder=d_encoder, groups=groups))
    y_grp = fwd2(xg, {"weight": wg})

    jax.block_until_ready((y_nchw, y_tok, y_bias, y_grp))

    # ---------- pure-jnp references: 1x1 grouped conv == block-diagonal matmul ----------
    ref_nchw = jnp.einsum("oc,bchw->bohw", w1, x_nchw)
    ref_tok = jnp.einsum("oc,bnc->bon", w1, x_tok).reshape(B, n_cls, H, W)
    ref_bias = ref_nchw + b1[None, :, None, None]
    ref_grp = jnp.einsum("gnd,bgdhw->bgnhw",
                         wg.reshape(groups, n_cls, d_encoder),
                         xg.reshape(B, groups, d_encoder, H, W)
                         ).reshape(B, groups * n_cls, H, W)

    assert y_nchw.shape == (B, n_cls, H, W)
    assert y_tok.shape == (B, n_cls, H, W)
    assert y_grp.shape == (B, groups * n_cls, H, W)
    assert jnp.allclose(y_nchw, ref_nchw, atol=1e-4, rtol=1e-4)
    assert jnp.allclose(y_tok, ref_tok, atol=1e-4, rtol=1e-4)
    assert jnp.allclose(y_bias, ref_bias, atol=1e-4, rtol=1e-4)
    assert jnp.allclose(y_grp, ref_grp, atol=1e-4, rtol=1e-4)

    print("KERNEL_OK")
</pallas_src>

<mosaic_0001>
module attributes {stable_mosaic.version = 11 : i64} {
  func.func @_conv1x1_kernel(%arg0: i32, %arg1: i32, %arg2: i32, %arg3: memref<1x32x256xf32, #tpu.memory_space<vmem>>, %arg4: memref<8x32xf32, #tpu.memory_space<vmem>>, %arg5: memref<1x8x256xf32, #tpu.memory_space<vmem>>) attributes {dimension_semantics = [#tpu.dimension_semantics<parallel>, #tpu.dimension_semantics<parallel>, #tpu.dimension_semantics<parallel>], iteration_bounds = array<i64: 1, 2, 1>, scalar_prefetch = 0 : i64, scratch_operands = 0 : i64, tpu.core_type = #tpu.core_type<tc>, window_params = [{transform_indices = @transform_0, window_bounds = array<i64: 1, 32, 256>}, {transform_indices = @transform_1, window_bounds = array<i64: 8, 32>}, {transform_indices = @transform_2, window_bounds = array<i64: 1, 8, 256>}]} {
    %c0 = arith.constant 0 : index
    %c0_0 = arith.constant 0 : index
    %0 = vector.load %arg4[%c0, %c0_0] : memref<8x32xf32, #tpu.memory_space<vmem>>, vector<8x32xf32>
    %c0_1 = arith.constant 0 : index
    %c0_2 = arith.constant 0 : index
    %c0_3 = arith.constant 0 : index
    %1 = vector.load %arg3[%c0_1, %c0_2, %c0_3] : memref<1x32x256xf32, #tpu.memory_space<vmem>>, vector<1x32x256xf32>
    %2 = vector.shape_cast %1 : vector<1x32x256xf32> to vector<32x256xf32>
    %cst = arith.constant dense<0.000000e+00> : vector<8x256xf32>
    %3 = tpu.matmul %0, %2, %cst {dimension_numbers = #tpu.dot_dimension_numbers<[1], [0], [0], [1], [0, 0, 1, 1], [], []>} : vector<8x32xf32>, vector<32x256xf32>, vector<8x256xf32> -> vector<8x256xf32>
    %c0_4 = arith.constant 0 : index
    %c0_5 = arith.constant 0 : index
    %c0_6 = arith.constant 0 : index
    %4 = vector.load %arg5[%c0_4, %c0_5, %c0_6] : memref<1x8x256xf32, #tpu.memory_space<vmem>>, vector<1x8x256xf32>
    %5 = vector.shape_cast %4 : vector<1x8x256xf32> to vector<8x256xf32>
    %6 = vector.shape_cast %3 : vector<8x256xf32> to vector<1x8x256xf32>
    tpu.vector_store %arg5[%c0_4, %c0_5, %c0_6], %6 {strides = array<i32>} : memref<1x8x256xf32, #tpu.memory_space<vmem>>, vector<1x8x256xf32>,
    return
  }
  func.func @transform_0(%arg0: i32, %arg1: i32, %arg2: i32) -> (i32, i32, i32) {
    %c0_i32 = arith.constant 0 : i32
    return %arg1, %arg0, %arg2 : i32, i32, i32
  }
  func.func @transform_1(%arg0: i32, %arg1: i32, %arg2: i32) -> (i32, i32) {
    %c0_i32 = arith.constant 0 : i32
    %c0_i32_0 = arith.constant 0 : i32
    return %arg0, %c0_i32 : i32, i32
  }
  func.func @transform_2(%arg0: i32, %arg1: i32, %arg2: i32) -> (i32, i32, i32) {
    %c0_i32 = arith.constant 0 : i32
    return %arg1, %arg0, %arg2 : i32, i32, i32
  }
}

</mosaic_0001>

<llo_original>
// kernel: decoder_simple_forward.1
$region0: #{decoder_simple_forward.1}
  #allocation0 [shape = 'u32[]', space=smem, size = 0x4, offset = 0x4, fixed_abs, tag = 'smem constant byte address 0x4 - core index']
  #allocation1 [shape = 'u32[144,128]{1,0:T(1,128)}', space=vmem, size = 0x12000, scoped, tag = 'internal scratch']
  %s0 = inlined_call_operand.vmem [shape: f32[2,32,256], index: 0, kind: input, shape index: {}]
  %s1 = inlined_call_operand.vmem [shape: f32[8,32], index: 1, kind: input, shape index: {}]
  %s2 = inlined_call_operand.vmem [shape: f32[2,8,256], index: 2, kind: output, shape index: {}]
  %s3 = sld [smem:[#allocation0]]
  $region41: #{decoder_simple_forward.1} parent=0
    _
  %s5 = ssub.s32 1, %s3
  %s6 = scalar_select 0, %s5, %s3
  loop: start=0, step=1, limit=4
  $region2: #{decoder_simple_forward.1} parent=0 // loop_pre_header
    _
  $region3: #{decoder_simple_forward.1} parent=0 // loop_header
    %s8 = sphi 0, %s12
    %p9 = scmp.ge.s32.totalorder %s8, 4
    %s15 = sphi 0, %s34
    %s16 = sphi 0, %s30
    %s17 = sphi 0, %s26
    %s18 = sphi 0, %s15
    %s19 = sphi 0, %s16
    %s20 = sphi 0, %s17
    %s21 = sphi 0, %s18
    %s22 = sphi 0, %s19
    %s23 = sphi 0, %s20
    %s41 = sphi 0, %s43
    %s44 = sphi 0, %s41
    %s45 = sphi 0, %s44
    %s61 = sphi 0, %s45
    %s67 = sphi 0, %s69
    %s70 = sphi 0, %s67
    %s71 = sphi 0, %s70
    %s87 = sphi 0, %s71
    %s97 = sphi 0, %s99
    %s100 = sphi 0, %s97
    %s101 = sphi 0, %s100
    %s117 = sphi 0, %s101
  $region4: #{decoder_simple_forward.1} parent=0 // loop_header_branch
    %11 = sbr.rel (%p9) target = $region8
  $region5: #{decoder_simple_forward.1} parent=0 // loop_body
    %s13 = ssub.s32 %s8, 1
    %s14 = ssub.s32 %s8, 2
    %s24 = sadd.s32 1, %s17
    %p25 = scmp.ge.s32.totalorder %s24, 1
    %s26 = scalar_select %p25, 0, %s24
    %s27 = sadd.s32 1, %s16
    %s28 = scalar_select %p25, %s27, %s16
    %p29 = scmp.ge.s32.totalorder %s28, 2
    %s30 = scalar_select %p29, 0, %s28
    %s31 = sadd.s32 1, %s15
    %s32 = scalar_select %p29, %s31, %s15
    %p33 = scmp.ge.s32.totalorder %s32, 1
    %s34 = scalar_select %p33, 0, %s32
    %s35 = ssub.s32 %s16, %s30
    %s36 = ssub.s32 %s15, %s34
    %s37 = sor.u32 %s35, %s36
    %s38 = ssub.s32 %s17, %s26
    %s39 = sor.u32 %s37, %s38
    %p40 = scmp.eq.s32.totalorder %s39, 0
    %s42 = sadd.s32 %s41, 1
    %s43 = scalar_select %p40, %s41, %s42
    %p46 = pneg %p40
    %p47 = scmp.eq.s32.totalorder %s8, 1
    %p48 = por %p46, %p47
    %p49 = scmp.ne.s32.totalorder %s41, %s44
    %p50 = scmp.eq.s32.totalorder %s8, 0
    %p51 = por %p49, %p50
    %p52 = scmp.ne.s32.totalorder %s41, %s44
    %p53 = scmp.eq.s32.totalorder %s13, 1
    %p54 = por %p52, %p53
    %p55 = scmp.ne.s32.totalorder %s44, %s45
    %p56 = scmp.eq.s32.totalorder %s13, 0
    %p57 = por %p55, %p56
    %p58 = scmp.ne.s32.totalorder %s44, %s45
    %p59 = scmp.eq.s32.totalorder %s14, 1
    %p60 = por %p58, %p59
    %p62 = scmp.ne.s32.totalorder %s45, %s61
    %p63 = scmp.eq.s32.totalorder %s14, 0
    %p64 = por %p62, %p63
    %s65 = ssub.s32 %s15, %s34
    %p66 = scmp.eq.s32.totalorder %s65, 0
    %s68 = sadd.s32 %s67, 1
    %s69 = scalar_select %p66, %s67, %s68
    %p72 = pneg %p66
    %p73 = scmp.eq.s32.totalorder %s8, 1
    %p74 = por %p72, %p73
    %p75 = scmp.ne.s32.totalorder %s67, %s70
    %p76 = scmp.eq.s32.totalorder %s8, 0
    %p77 = por %p75, %p76
    %p78 = scmp.ne.s32.totalorder %s67, %s70
    %p79 = scmp.eq.s32.totalorder %s13, 1
    %p80 = por %p78, %p79
    %p81 = scmp.ne.s32.totalorder %s70, %s71
    %p82 = scmp.eq.s32.totalorder %s13, 0
    %p83 = por %p81, %p82
    %p84 = scmp.ne.s32.totalorder %s70, %s71
    %p85 = scmp.eq.s32.totalorder %s14, 1
    %p86 = por %p84, %p85
    %p88 = scmp.ne.s32.totalorder %s71, %s87
    %p89 = scmp.eq.s32.totalorder %s14, 0
    %p90 = por %p88, %p89
    %s91 = ssub.s32 %s16, %s30
    %s92 = ssub.s32 %s15, %s34
    %s93 = sor.u32 %s91, %s92
    %s94 = ssub.s32 %s17, %s26
    %s95 = sor.u32 %s93, %s94
    %p96 = scmp.eq.s32.totalorder %s95, 0
    %s98 = sadd.s32 %s97, 1
    %s99 = scalar_select %p96, %s97, %s98
    %p102 = pneg %p96
    %p103 = scmp.eq.s32.totalorder %s8, 1
    %p104 = por %p102, %p103
    %p105 = scmp.ne.s32.totalorder %s97, %s100
    %p106 = scmp.eq.s32.totalorder %s8, 0
    %p107 = por %p105, %p106
    %p108 = scmp.ne.s32.totalorder %s97, %s100
    %p109 = scmp.eq.s32.totalorder %s13, 1
    %p110 = por %p108, %p109
    %p111 = scmp.ne.s32.totalorder %s100, %s101
    %p112 = scmp.eq.s32.totalorder %s13, 0
    %p113 = por %p111, %p112
    %p114 = scmp.ne.s32.totalorder %s100, %s101
    %p115 = scmp.eq.s32.totalorder %s14, 1
    %p116 = por %p114, %p115
    %p118 = scmp.ne.s32.totalorder %s101, %s117
    %p119 = scmp.eq.s32.totalorder %s14, 0
    %p120 = por %p118, %p119
    %p121 = scmp.le.s32.totalorder 1, %s8
    %p122 = scmp.lt.s32.totalorder %s8, 3
    %p123 = pnand %p121, %p122
    %p124 = pneg %p123
    // Predicated region
    $region9: #{decoder_simple_forward.1} parent=5 // pred_check
      _
    $region10: #{decoder_simple_forward.1} parent=5 // pred_check_branch
      %126 = sbr.rel (%p123) target = $region12
    $region11: #{decoder_simple_forward.1} parent=5 // pred_region
      %s127 = ssub.s32 %s8, 1
      // Predicated region
      $region13: #{decoder_simple_forward.1} parent=11 // pred_check
        %p128 = pneg %p83
      $region14: #{decoder_simple_forward.1} parent=11 // pred_check_branch
        %130 = sbr.rel (%p128) target = $region16
      $region15: #{decoder_simple_forward.1} parent=11 // pred_region
        %p131 = scmp.lt.s32.totalorder %s18, 0
        %s132 = scalar_select %p131, %s18, 0
        %s133 = smul.addr %s132, 8
        %s134 = scalar_lea.vmem %s1, %s133
      $region16: #{decoder_simple_forward.1} parent=11 // pred_fallthru
        _
    $region12: #{decoder_simple_forward.1} parent=5 // pred_fallthru
      _
    %p135 = scmp.lt.s32.totalorder %s8, 2
    // Predicated region
    $region17: #{decoder_simple_forward.1} parent=5 // pred_check
      %p136 = pneg %p135
    $region18: #{decoder_simple_forward.1} parent=5 // pred_check_branch
      %138 = sbr.rel (%p136) target = $region20
    $region19: #{decoder_simple_forward.1} parent=5 // pred_region
      // Predicated region
      $region21: #{decoder_simple_forward.1} parent=19 // pred_check
        %p139 = pneg %p51
      $region22: #{decoder_simple_forward.1} parent=19 // pred_check_branch
        %141 = sbr.rel (%p139) target = $region24
      $region23: #{decoder_simple_forward.1} parent=19 // pred_region
        %s142 = smul.u32 4, %s15
        %s143 = smul.u32 2, %s17
        %p144 = scmp.lt.s32.totalorder %s16, 1
        %s145 = scalar_select %p144, %s16, 1
        %p146 = scmp.lt.s32.totalorder %s142, 3
        %s147 = scalar_select %p146, %s142, 3
        %p148 = scmp.lt.s32.totalorder %s143, 1
        %s149 = scalar_select %p148, %s143, 1
        %s150 = smul.addr %s147, 2
        %s151 = sadd.s32 %s149, %s150
        %s152 = smul.addr %s145, 8
        %s153 = sadd.s32 %s151, %s152
        %s154 = smul.addr %s153, 8
        %s155 = scalar_lea.vmem %s0, %s154
        %s156 = smul.u32 4, %s15
        %s157 = smul.u32 2, %s17
      $region24: #{decoder_simple_forward.1} parent=19 // pred_fallthru
        _
    $region20: #{decoder_simple_forward.1} parent=5 // pred_fallthru
      _
    %p158 = scmp.le.s32.totalorder 1, %s8
    %p159 = scmp.lt.s32.totalorder %s8, 3
    %p160 = pnand %p158, %p159
    %p161 = pneg %p160
    // Predicated region
    $region25: #{decoder_simple_forward.1} parent=5 // pred_check
      _
    $region26: #{decoder_simple_forward.1} parent=5 // pred_check_branch
      %163 = sbr.rel (%p160) target = $region28
    $region27: #{decoder_simple_forward.1} parent=5 // pred_region
      %s164 = ssub.s32 %s8, 1
      %s165 = smul.u32 4, %s18
      %s166 = smul.u32 2, %s20
      %p167 = scmp.lt.s32.totalorder %s19, 1
      %s168 = scalar_select %p167, %s19, 1
      %p169 = scmp.lt.s32.totalorder %s165, 3
      %s170 = scalar_select %p169, %s165, 3
      %p171 = scmp.lt.s32.totalorder %s166, 1
      %s172 = scalar_select %p171, %s166, 1
      %s173 = smul.addr %s170, 2
      %s174 = sadd.s32 %s172, %s173
      %s175 = smul.addr %s168, 8
      %s176 = sadd.s32 %s174, %s175
      %s177 = smul.addr %s176, 8
      %s178 = scalar_lea.vmem %s0, %s177
      %p179 = pneg %p57
      %p180 = pneg %p54
      %p181 = scmp.lt.s32.totalorder %s18, 0
      %s182 = scalar_select %p181, %s18, 0
      %s183 = smul.addr %s182, 8
      %s184 = scalar_lea.vmem %s1, %s183
      %p185 = pneg %p83
      %p186 = pneg %p80
      %p187 = pneg %p113
      %p188 = pneg %p110
      %s189 = smul.u32 2, %s20
      %p190 = scmp.lt.s32.totalorder %s19, 1
      %s191 = scalar_select %p190, %s19, 1
      %p192 = scmp.lt.s32.totalorder %s18, 0
      %s193 = scalar_select %p192, %s18, 0
      %p194 = scmp.lt.s32.totalorder %s189, 1
      %s195 = scalar_select %p194, %s189, 1
      %s196 = smul.addr %s193, 2
      %s197 = sadd.s32 %s195, %s196
      %s198 = smul.addr %s191, 2
      %s199 = sadd.s32 %s197, %s198
      %s200 = smul.addr %s199, 8
      %s201 = scalar_lea.vmem %s2, %s200
      %s202 = smul.u32 4, %s18
      %s203 = smul.u32 2, %s20
      %p204 = scmp.lt.s32.totalorder %s19, 1
      %s205 = scalar_select %p204, %s19, 1
      %p206 = scmp.lt.s32.totalorder %s202, 3
      %s207 = scalar_select %p206, %s202, 3
      %p208 = scmp.lt.s32.totalorder %s203, 1
      %s209 = scalar_select %p208, %s203, 1
      %s210 = smul.addr %s207, 2
      %s211 = sadd.s32 %s209, %s210
      %s212 = smul.addr %s205, 8
      %s213 = sadd.s32 %s211, %s212
      %s214 = smul.addr %s213, 8
      %s215 = scalar_lea.vmem %s0, %s214
      %s216 = smul.u32 4, %s18
      %s217 = smul.u32 2, %s20
      %p218 = scmp.lt.s32.totalorder %s18, 0
      %s219 = scalar_select %p218, %s18, 0
      %s220 = smul.addr %s219, 8
      %s221 = scalar_lea.vmem %s1, %s220
      %s222 = smul.u32 2, %s20
      %p223 = scmp.lt.s32.totalorder %s19, 1
      %s224 = scalar_select %p223, %s19, 1
      %p225 = scmp.lt.s32.totalorder %s18, 0
      %s226 = scalar_select %p225, %s18, 0
      %p227 = scmp.lt.s32.totalorder %s222, 1
      %s228 = scalar_select %p227, %s222, 1
      %s229 = smul.addr %s226, 2
      %s230 = sadd.s32 %s228, %s229
      %s231 = smul.addr %s224, 2
      %s232 = sadd.s32 %s230, %s231
      %s233 = smul.addr %s232, 8
      %s234 = scalar_lea.vmem %s2, %s233
      %s235 = smul.u32 2, %s20
      %v236 = vld [vmem:[%s221] sm:$0xff]
      %v237 = vld [vmem:[%s215] sm:$0xff]
      %v238 = vld [vmem:[%s215 + $0x8] sm:$0xff]
      %v239 = vld [vmem:[%s215 + $0x10] sm:$0xff]
      %v240 = vld [vmem:[%s215 + $0x18] sm:$0xff]
      %v241 = vld [vmem:[%s215 + $0x20] sm:$0xff]
      %v242 = vld [vmem:[%s215 + $0x28] sm:$0xff]
      %v243 = vld [vmem:[%s215 + $0x30] sm:$0xff]
      %v244 = vld [vmem:[%s215 + $0x38] sm:$0xff]
      %vm245 = vcmask 261120
      %v247 = vsel %vm245, %v236, 0
      %249 = vmatprep.subr.mxu0 0.0
      %250 = vmatpush1.msra.mxu0 0.0
      %251 = vmatprep.subr.mxu0 0.0
      %252 = vmatpush1.msra.mxu0 0.0
      %253 = vmatprep.subr.mxu0 0.0
      %254 = vmatpush1.msra.mxu0 0.0
      %255 = vmatprep.subr.mxu0 0.0
      %256 = vmatpush1.msra.mxu0 0.0
      %257 = vmatprep.subr.mxu0 0.0
      %258 = vmatpush1.msra.mxu0 0.0
      %259 = vmatprep.subr.mxu0 0.0
      %260 = vmatpush1.msra.mxu0 0.0
      %261 = vmatprep.subr.mxu0 0.0
      %262 = vmatpush1.msra.mxu0 0.0
      %263 = vmatprep.subr.mxu0 0.0
      %264 = vmatpush1.msra.mxu0 0.0
      %265 = vmatprep.subr.mxu0 0.0
      %266 = vmatpush1.msra.mxu0 0.0
      %267 = vmatprep.subr.mxu0 0.0
      %268 = vmatpush1.msra.mxu0 0.0
      %269 = vmatprep.subr.mxu0 0.0
      %270 = vmatpush1.msra.mxu0 0.0
      %271 = vmatprep.subr.mxu0 0.0
      %272 = vmatpush1.msra.mxu0 0.0
      %273 = vmatprep.subr.mxu0 %v244
      %274 = vmatpush1.msra.mxu0 %v243
      %275 = vmatprep.subr.mxu0 %v242
      %276 = vmatpush1.msra.mxu0 %v241
      %277 = vmatprep.subr.mxu0 %v240
      %278 = vmatpush1.msra.mxu0 %v239
      %279 = vmatprep.subr.mxu0 %v238
      %280 = vmatpush1.msra.mxu0 %v237
      %281 = vmatprep.subr.mxu0 0.0
      %282 = vmatpush2.msra.mxu0 0.0
      %283 = vmatprep.subr.mxu0 0.0
      %284 = vmatpush2.msra.mxu0 0.0
      %285 = vmatprep.subr.mxu0 0.0
      %286 = vmatpush2.msra.mxu0 0.0
      %287 = vmatprep.subr.mxu0 0.0
      %288 = vmatpush2.msra.mxu0 0.0
      %289 = vmatprep.subr.mxu0 0.0
      %290 = vmatpush2.msra.mxu0 0.0
      %291 = vmatprep.subr.mxu0 0.0
      %292 = vmatpush2.msra.mxu0 0.0
      %293 = vmatprep.subr.mxu0 0.0
      %294 = vmatpush2.msra.mxu0 0.0
      %295 = vmatprep.subr.mxu0 0.0
      %296 = vmatpush2.msra.mxu0 0.0
      %297 = vmatprep.subr.mxu0 0.0
      %298 = vmatpush2.msra.mxu0 0.0
      %299 = vmatprep.subr.mxu0 0.0
      %300 = vmatpush2.msra.mxu0 0.0
      %301 = vmatprep.subr.mxu0 0.0
      %302 = vmatpush2.msra.mxu0 0.0
      %303 = vmatprep.subr.mxu0 0.0
      %304 = vmatpush2.msra.mxu0 0.0
      %305 = vmatprep.subr.mxu0 0.0
      %306 = vmatpush2.msra.mxu0 0.0
      %307 = vmatprep.subr.mxu0 0.0
      %308 = vmatpush2.msra.mxu0 0.0
      %309 = vmatprep.subr.mxu0 0.0
      %310 = vmatpush2.msra.mxu0 0.0
      %311 = vmatprep.subr.mxu0 0.0
      %312 = vmatpush2.msra.mxu0 0.0
      %313 = vmatprep.mubr.f32.mxu0 0.0
      %314 = vmatmul.mubr.f32.gmra.mxu0 %v247
      %v315 = vpop.f32.mrf.mxu0
      %v316 = vadd.f32 0.0, %v315
      %v317 = vpop.f32.mrf.mxu0
      %v318 = vadd.f32 0.0, %v317
      %319 = vdwg.mxu0
      %320 = vst [vmem:[%s234] sm:$0xff] %v316
      %321 = vst [vmem:[%s234 + $0x8] sm:$0xff] %v318
      %s322 = smul.u32 2, %s20
      %p323 = scmp.lt.s32.totalorder %s19, 1
      %s324 = scalar_select %p323, %s19, 1
      %p325 = scmp.lt.s32.totalorder %s18, 0
      %s326 = scalar_select %p325, %s18, 0
      %p327 = scmp.lt.s32.totalorder %s322, 1
      %s328 = scalar_select %p327, %s322, 1
      %s329 = smul.addr %s326, 2
      %s330 = sadd.s32 %s328, %s329
      %s331 = smul.addr %s324, 2
      %s332 = sadd.s32 %s330, %s331
      %s333 = smul.addr %s332, 8
      %s334 = scalar_lea.vmem %s2, %s333
      // Predicated region
      $region29: #{decoder_simple_forward.1} parent=27 // pred_check
        %p335 = pneg %p110
      $region30: #{decoder_simple_forward.1} parent=27 // pred_check_branch
        %337 = sbr.rel (%p335) target = $region32
      $region31: #{decoder_simple_forward.1} parent=27 // pred_region
        %s338 = smul.u32 2, %s20
      $region32: #{decoder_simple_forward.1} parent=27 // pred_fallthru
        _
    $region28: #{decoder_simple_forward.1} parent=5 // pred_fallthru
      _
    %p339 = scmp.le.s32.totalorder 2, %s8
    // Predicated region
    $region33: #{decoder_simple_forward.1} parent=5 // pred_check
      %p340 = pneg %p339
    $region34: #{decoder_simple_forward.1} parent=5 // pred_check_branch
      %342 = sbr.rel (%p340) target = $region36
    $region35: #{decoder_simple_forward.1} parent=5 // pred_region
      %s343 = ssub.s32 %s8, 2
      // Predicated region
      $region37: #{decoder_simple_forward.1} parent=35 // pred_check
        %p344 = pneg %p116
      $region38: #{decoder_simple_forward.1} parent=35 // pred_check_branch
        %346 = sbr.rel (%p344) target = $region40
      $region39: #{decoder_simple_forward.1} parent=35 // pred_region
        %s347 = smul.u32 2, %s23
        %p348 = scmp.lt.s32.totalorder %s22, 1
        %s349 = scalar_select %p348, %s22, 1
        %p350 = scmp.lt.s32.totalorder %s21, 0
        %s351 = scalar_select %p350, %s21, 0
        %p352 = scmp.lt.s32.totalorder %s347, 1
        %s353 = scalar_select %p352, %s347, 1
        %s354 = smul.addr %s351, 2
        %s355 = sadd.s32 %s353, %s354
        %s356 = smul.addr %s349, 2
        %s357 = sadd.s32 %s355, %s356
        %s358 = smul.addr %s357, 8
        %s359 = scalar_lea.vmem %s2, %s358
      $region40: #{decoder_simple_forward.1} parent=35 // pred_fallthru
        _
    $region36: #{decoder_simple_forward.1} parent=5 // pred_fallthru
      _
  $region6: #{decoder_simple_forward.1} parent=0 // loop_footer
    %s12 = sadd.s32 1, %s8
  $region7: #{decoder_simple_forward.1} parent=0 // loop_footer_branch
    %7 = sbr.rel target = $region3
  $region8: #{decoder_simple_forward.1} parent=0 // loop_exit
    _

</llo_original>
